<compile_context>
chip_gen: v7x
topology: tpu7x:2x2x1
jax: 0.10.0
libtpu: 0.0.40
codegen_flags: <defaults>
</compile_context>

<pallas_src>
import functools

import jax
import jax.numpy as jnp
from jax.experimental import pallas as pl
from jax.experimental.pallas import tpu as pltpu


def _round_up(x, m):
    return ((x + m - 1) // m) * m


# ----------------------------------------------------------------------------
# Kernel
# ----------------------------------------------------------------------------
def _mlp_kernel(num_stages, x_ref, w_ref, b_ref, out_ref):
    # x_ref: (TM, H) bf16  |  w_ref: (2S+2, H, H) bf16  |  b_ref: (2S+2, 1, H) f32
    # out_ref: (TM, H) f32  (valid output columns are [:out_features])
    #
    # input layer: Linear + (folded) BN + ReLU   (dropout == identity in eval)
    y = jnp.dot(x_ref[...], w_ref[0], preferred_element_type=jnp.float32)
    y = jnp.maximum(y + b_ref[0], 0.0)

    # residual stages: two (Linear + BN + ReLU) then skip connection
    for s in range(num_stages):
        wa = w_ref[1 + 2 * s]          # (H, H) bf16
        wb = w_ref[2 + 2 * s]          # (H, H) bf16
        ba = b_ref[1 + 2 * s]          # (1, H) f32
        bb = b_ref[2 + 2 * s]          # (1, H) f32
        h = jnp.dot(y.astype(jnp.bfloat16), wa, preferred_element_type=jnp.float32)
        h = jnp.maximum(h + ba, 0.0)
        h = jnp.dot(h.astype(jnp.bfloat16), wb, preferred_element_type=jnp.float32)
        h = jnp.maximum(h + bb, 0.0)
        y = y + h

    # output projection (no BN / activation); padded columns are zeros.
    last = 2 * num_stages + 1
    out = jnp.dot(y.astype(jnp.bfloat16), w_ref[last],
                  preferred_element_type=jnp.float32) + b_ref[last]
    out_ref[...] = out


# ----------------------------------------------------------------------------
# One-time weight packing (hoisted out of the per-call hot path).
# ----------------------------------------------------------------------------
def pack_params(params, num_stages):
    """params: flat list [w1, b1, (wa, ba, wb, bb)*num_stages, w2, b2], BN folded, f32.

    Returns (w_stack bf16 (2S+2,H,H), b_stack f32 (2S+2,1,H), meta dict).
    """
    w1, b1 = params[0], params[1]
    w2, b2 = params[-2], params[-1]
    input_size, hidden = w1.shape
    output_size = w2.shape[1]

    assert hidden % 128 == 0, "hidden must be a multiple of 128 for lane-dense tiles"
    assert input_size <= hidden, "input_size must fit in a single (H,H) stacked slot"
    assert output_size <= hidden, "output_size must fit in a single (H,H) stacked slot"

    # Pad w1 / w2 to (H, H) so every layer lives in one stacked tensor.
    w1_p = jnp.zeros((hidden, hidden), jnp.float32).at[:input_size, :].set(w1)
    w2_p = jnp.zeros((hidden, hidden), jnp.float32).at[:, :output_size].set(w2)
    b1_p = b1.reshape(1, hidden)
    b2_p = jnp.zeros((1, hidden), jnp.float32).at[:, :output_size].set(b2)

    ws = [w1_p]
    bs = [b1_p]
    for s in range(num_stages):
        wa, ba, wb, bb = params[2 + 4 * s: 2 + 4 * s + 4]
        ws += [wa, wb]
        bs += [ba.reshape(1, hidden), bb.reshape(1, hidden)]
    ws += [w2_p]
    bs += [b2_p]

    w_stack = jnp.stack(ws).astype(jnp.bfloat16)   # (2S+2, H, H)
    b_stack = jnp.stack(bs).astype(jnp.float32)    # (2S+2, 1, H)
    meta = dict(num_stages=num_stages, input_size=input_size,
                hidden=hidden, output_size=output_size)
    return w_stack, b_stack, meta


# ----------------------------------------------------------------------------
# Forward wrapper (hot path: only x pad/cast + pallas_call + output slice).
# ----------------------------------------------------------------------------
def baseline_forward(x, w_stack, b_stack, *, num_stages, input_size, output_size):
    batch = x.shape[0]
    hidden = w_stack.shape[-1]

    # Batch tiling: 16-row granularity (bf16 sublane tile), 256-row tiles for big batch.
    if batch <= 256:
        batch_pad = _round_up(batch, 16)
        tm = batch_pad
    else:
        tm = 256
        batch_pad = _round_up(batch, tm)

    # Only per-call data prep: zero-pad x to (batch_pad, hidden) and cast to bf16.
    x_p = jnp.zeros((batch_pad, hidden), jnp.bfloat16)
    x_p = x_p.at[:batch, :input_size].set(x.astype(jnp.bfloat16))

    n_layers = 2 * num_stages + 2
    flops = 2 * batch_pad * hidden * hidden * n_layers
    bytes_accessed = (w_stack.size * 2 + b_stack.size * 4
                      + batch_pad * hidden * 2 + batch_pad * hidden * 4)

    kernel = functools.partial(_mlp_kernel, num_stages)
    out_p = pl.pallas_call(
        kernel,
        out_shape=jax.ShapeDtypeStruct((batch_pad, hidden), jnp.float32),
        grid=(batch_pad // tm,),
        in_specs=[
            pl.BlockSpec((tm, hidden), lambda i: (i, 0)),                 # x tiles
            pl.BlockSpec((n_layers, hidden, hidden), lambda i: (0, 0, 0)),  # resident W
            pl.BlockSpec((n_layers, 1, hidden), lambda i: (0, 0, 0)),       # resident b
        ],
        out_specs=pl.BlockSpec((tm, hidden), lambda i: (i, 0)),
        compiler_params=pltpu.CompilerParams(dimension_semantics=("parallel",)),
        cost_estimate=pl.CostEstimate(flops=flops, transcendentals=0,
                                      bytes_accessed=bytes_accessed),
    )(x_p, w_stack, b_stack)

    return out_p[:batch, :output_size]


# ----------------------------------------------------------------------------
# Deterministic parameter construction (PyTorch-style init) + BN folding (eval).
# ----------------------------------------------------------------------------
_BN_EPS = 1e-5


def _linear_init(key, fan_in, fan_out):
    kw, kb = jax.random.split(key)
    bound = 1.0 / jnp.sqrt(fan_in)
    w = jax.random.uniform(kw, (fan_in, fan_out), jnp.float32, -bound, bound)
    b = jax.random.uniform(kb, (1, fan_out), jnp.float32, -bound, bound)
    return w, b


def _bn_init(key, features):
    k1, k2, k3, k4 = jax.random.split(key, 4)
    gamma = 1.0 + 0.1 * jax.random.normal(k1, (1, features), jnp.float32)
    beta = 0.1 * jax.random.normal(k2, (1, features), jnp.float32)
    mean = 0.1 * jax.random.normal(k3, (1, features), jnp.float32)
    var = jax.random.uniform(k4, (1, features), jnp.float32, 0.5, 1.5)
    return gamma, beta, mean, var


def _fold_bn(w, b, bn):
    gamma, beta, mean, var = bn
    scale = gamma / jnp.sqrt(var + _BN_EPS)
    return w * scale, (b - mean) * scale + beta


def init_params(key, input_size, hidden, output_size, num_stages):
    keys = jax.random.split(key, 2 + 4 * num_stages + 1)
    ki = iter(range(len(keys)))

    params = []
    w1, b1 = _linear_init(keys[next(ki)], input_size, hidden)
    bn1 = _bn_init(keys[next(ki)], hidden)
    w1f, b1f = _fold_bn(w1, b1, bn1)
    params += [w1f, b1f]

    for _ in range(num_stages):
        wa, ba = _linear_init(keys[next(ki)], hidden, hidden)
        bna = _bn_init(keys[next(ki)], hidden)
        waf, baf = _fold_bn(wa, ba, bna)
        wb, bb = _linear_init(keys[next(ki)], hidden, hidden)
        bnb = _bn_init(keys[next(ki)], hidden)
        wbf, bbf = _fold_bn(wb, bb, bnb)
        params += [waf, baf, wbf, bbf]

    w2, b2 = _linear_init(keys[next(ki)], hidden, output_size)
    params += [w2, b2]
    return params


def reference_forward(x, params, num_stages):
    """Pure-JAX f32 reference of the same (BN-folded, eval-mode) forward pass."""
    w1, b1 = params[0], params[1]
    y = jnp.maximum(x @ w1 + b1, 0.0)
    off = 2
    for _ in range(num_stages):
        wa, ba, wb, bb = params[off:off + 4]
        off += 4
        h = jnp.maximum(y @ wa + ba, 0.0)
        h = jnp.maximum(h @ wb + bb, 0.0)
        y = y + h
    w2, b2 = params[off], params[off + 1]
    return y @ w2 + b2


if __name__ == "__main__":
    # Small config consistent with the module: num_in_kpts=17 -> input 51,
    # num_out_kpts=4 -> output 12, linear_size=128 (small), num_stages=2.
    BATCH = 8
    NUM_IN_KPTS = 17
    NUM_OUT_KPTS = 4
    HIDDEN = 128
    NUM_STAGES = 2
    input_size = NUM_IN_KPTS * 3     # 51
    output_size = NUM_OUT_KPTS * 3   # 12

    root = jax.random.PRNGKey(0)
    k_x, k_p = jax.random.split(root)
    x = jax.random.normal(k_x, (BATCH, input_size), jnp.float32)
    params = init_params(k_p, input_size, HIDDEN, output_size, NUM_STAGES)

    # One-time pack (BN already folded in init_params); hot path is fwd(x) only.
    w_stack, b_stack, meta = pack_params(params, NUM_STAGES)
    w_stack, b_stack = jax.block_until_ready((w_stack, b_stack))

    fwd = jax.jit(functools.partial(
        baseline_forward,
        num_stages=meta["num_stages"],
        input_size=meta["input_size"],
        output_size=meta["output_size"]))

    out = fwd(x, w_stack, b_stack)
    out = jax.block_until_ready(out)

    ref = reference_forward(x, params, NUM_STAGES)
    assert out.shape == (BATCH, output_size)
    assert jnp.allclose(out, ref, rtol=5e-2, atol=5e-2), "mismatch vs JAX reference"

    print("KERNEL_OK")
</pallas_src>

<mosaic_0001>
module attributes {stable_mosaic.version = 11 : i64} {
  func.func @_mlp_kernel(%arg0: i32, %arg1: memref<16x128xbf16, #tpu.memory_space<vmem>>, %arg2: memref<6x128x128xbf16, #tpu.memory_space<vmem>>, %arg3: memref<6x1x128xf32, #tpu.memory_space<vmem>>, %arg4: memref<16x128xf32, #tpu.memory_space<vmem>>) attributes {dimension_semantics = [#tpu.dimension_semantics<parallel>], iteration_bounds = array<i64: 1>, scalar_prefetch = 0 : i64, scratch_operands = 0 : i64, tpu.core_type = #tpu.core_type<tc>, window_params = [{transform_indices = @transform_0, window_bounds = array<i64: 16, 128>}, {pipeline_mode = #tpu.pipeline_mode<synchronous>, transform_indices = @transform_1, window_bounds = array<i64: 6, 128, 128>}, {pipeline_mode = #tpu.pipeline_mode<synchronous>, transform_indices = @transform_2, window_bounds = array<i64: 6, 1, 128>}, {transform_indices = @transform_3, window_bounds = array<i64: 16, 128>}]} {
    %c0 = arith.constant 0 : index
    %c0_0 = arith.constant 0 : index
    %0 = vector.load %arg1[%c0, %c0_0] : memref<16x128xbf16, #tpu.memory_space<vmem>>, vector<16x128xbf16>
    %c0_1 = arith.constant 0 : index
    %c0_2 = arith.constant 0 : index
    %c0_3 = arith.constant 0 : index
    %1 = vector.load %arg2[%c0_1, %c0_2, %c0_3] : memref<6x128x128xbf16, #tpu.memory_space<vmem>>, vector<1x128x128xbf16>
    %2 = vector.shape_cast %1 : vector<1x128x128xbf16> to vector<128x128xbf16>
    %cst = arith.constant dense<0.000000e+00> : vector<16x128xf32>
    %3 = tpu.matmul %0, %2, %cst {dimension_numbers = #tpu.dot_dimension_numbers<[1], [0], [0], [1], [0, 0, 1, 1], [], []>} : vector<16x128xbf16>, vector<128x128xbf16>, vector<16x128xf32> -> vector<16x128xf32>
    %c0_4 = arith.constant 0 : index
    %c0_5 = arith.constant 0 : index
    %c0_6 = arith.constant 0 : index
    %4 = vector.load %arg3[%c0_4, %c0_5, %c0_6] : memref<6x1x128xf32, #tpu.memory_space<vmem>>, vector<1x1x128xf32>
    %5 = vector.shape_cast %4 : vector<1x1x128xf32> to vector<1x128xf32>
    %6 = vector.broadcast %5 : vector<1x128xf32> to vector<16x128xf32>
    %7 = arith.addf %3, %6 : vector<16x128xf32>
    %cst_7 = arith.constant 0.000000e+00 : f32
    %8 = vector.broadcast %cst_7 : f32 to vector<16x128xf32>
    %9 = arith.maximumf %7, %8 : vector<16x128xf32>
    %c1 = arith.constant 1 : index
    %c0_8 = arith.constant 0 : index
    %c0_9 = arith.constant 0 : index
    %10 = vector.load %arg2[%c1, %c0_8, %c0_9] : memref<6x128x128xbf16, #tpu.memory_space<vmem>>, vector<1x128x128xbf16>
    %11 = vector.shape_cast %10 : vector<1x128x128xbf16> to vector<128x128xbf16>
    %c2 = arith.constant 2 : index
    %c0_10 = arith.constant 0 : index
    %c0_11 = arith.constant 0 : index
    %12 = vector.load %arg2[%c2, %c0_10, %c0_11] : memref<6x128x128xbf16, #tpu.memory_space<vmem>>, vector<1x128x128xbf16>
    %13 = vector.shape_cast %12 : vector<1x128x128xbf16> to vector<128x128xbf16>
    %c1_12 = arith.constant 1 : index
    %c0_13 = arith.constant 0 : index
    %c0_14 = arith.constant 0 : index
    %14 = vector.load %arg3[%c1_12, %c0_13, %c0_14] : memref<6x1x128xf32, #tpu.memory_space<vmem>>, vector<1x1x128xf32>
    %15 = vector.shape_cast %14 : vector<1x1x128xf32> to vector<1x128xf32>
    %c2_15 = arith.constant 2 : index
    %c0_16 = arith.constant 0 : index
    %c0_17 = arith.constant 0 : index
    %16 = vector.load %arg3[%c2_15, %c0_16, %c0_17] : memref<6x1x128xf32, #tpu.memory_space<vmem>>, vector<1x1x128xf32>
    %17 = vector.shape_cast %16 : vector<1x1x128xf32> to vector<1x128xf32>
    %18 = arith.truncf %9 : vector<16x128xf32> to vector<16x128xbf16>
    %cst_18 = arith.constant dense<0.000000e+00> : vector<16x128xf32>
    %19 = tpu.matmul %18, %11, %cst_18 {dimension_numbers = #tpu.dot_dimension_numbers<[1], [0], [0], [1], [0, 0, 1, 1], [], []>} : vector<16x128xbf16>, vector<128x128xbf16>, vector<16x128xf32> -> vector<16x128xf32>
    %20 = vector.broadcast %15 : vector<1x128xf32> to vector<16x128xf32>
    %21 = arith.addf %19, %20 : vector<16x128xf32>
    %cst_19 = arith.constant 0.000000e+00 : f32
    %22 = vector.broadcast %cst_19 : f32 to vector<16x128xf32>
    %23 = arith.maximumf %21, %22 : vector<16x128xf32>
    %24 = arith.truncf %23 : vector<16x128xf32> to vector<16x128xbf16>
    %cst_20 = arith.constant dense<0.000000e+00> : vector<16x128xf32>
    %25 = tpu.matmul %24, %13, %cst_20 {dimension_numbers = #tpu.dot_dimension_numbers<[1], [0], [0], [1], [0, 0, 1, 1], [], []>} : vector<16x128xbf16>, vector<128x128xbf16>, vector<16x128xf32> -> vector<16x128xf32>
    %26 = vector.broadcast %17 : vector<1x128xf32> to vector<16x128xf32>
    %27 = arith.addf %25, %26 : vector<16x128xf32>
    %cst_21 = arith.constant 0.000000e+00 : f32
    %28 = vector.broadcast %cst_21 : f32 to vector<16x128xf32>
    %29 = arith.maximumf %27, %28 : vector<16x128xf32>
    %30 = arith.addf %9, %29 : vector<16x128xf32>
    %c3 = arith.constant 3 : index
    %c0_22 = arith.constant 0 : index
    %c0_23 = arith.constant 0 : index
    %31 = vector.load %arg2[%c3, %c0_22, %c0_23] : memref<6x128x128xbf16, #tpu.memory_space<vmem>>, vector<1x128x128xbf16>
    %32 = vector.shape_cast %31 : vector<1x128x128xbf16> to vector<128x128xbf16>
    %c4 = arith.constant 4 : index
    %c0_24 = arith.constant 0 : index
    %c0_25 = arith.constant 0 : index
    %33 = vector.load %arg2[%c4, %c0_24, %c0_25] : memref<6x128x128xbf16, #tpu.memory_space<vmem>>, vector<1x128x128xbf16>
    %34 = vector.shape_cast %33 : vector<1x128x128xbf16> to vector<128x128xbf16>
    %c3_26 = arith.constant 3 : index
    %c0_27 = arith.constant 0 : index
    %c0_28 = arith.constant 0 : index
    %35 = vector.load %arg3[%c3_26, %c0_27, %c0_28] : memref<6x1x128xf32, #tpu.memory_space<vmem>>, vector<1x1x128xf32>
    %36 = vector.shape_cast %35 : vector<1x1x128xf32> to vector<1x128xf32>
    %c4_29 = arith.constant 4 : index
    %c0_30 = arith.constant 0 : index
    %c0_31 = arith.constant 0 : index
    %37 = vector.load %arg3[%c4_29, %c0_30, %c0_31] : memref<6x1x128xf32, #tpu.memory_space<vmem>>, vector<1x1x128xf32>
    %38 = vector.shape_cast %37 : vector<1x1x128xf32> to vector<1x128xf32>
    %39 = arith.truncf %30 : vector<16x128xf32> to vector<16x128xbf16>
    %cst_32 = arith.constant dense<0.000000e+00> : vector<16x128xf32>
    %40 = tpu.matmul %39, %32, %cst_32 {dimension_numbers = #tpu.dot_dimension_numbers<[1], [0], [0], [1], [0, 0, 1, 1], [], []>} : vector<16x128xbf16>, vector<128x128xbf16>, vector<16x128xf32> -> vector<16x128xf32>
    %41 = vector.broadcast %36 : vector<1x128xf32> to vector<16x128xf32>
    %42 = arith.addf %40, %41 : vector<16x128xf32>
    %cst_33 = arith.constant 0.000000e+00 : f32
    %43 = vector.broadcast %cst_33 : f32 to vector<16x128xf32>
    %44 = arith.maximumf %42, %43 : vector<16x128xf32>
    %45 = arith.truncf %44 : vector<16x128xf32> to vector<16x128xbf16>
    %cst_34 = arith.constant dense<0.000000e+00> : vector<16x128xf32>
    %46 = tpu.matmul %45, %34, %cst_34 {dimension_numbers = #tpu.dot_dimension_numbers<[1], [0], [0], [1], [0, 0, 1, 1], [], []>} : vector<16x128xbf16>, vector<128x128xbf16>, vector<16x128xf32> -> vector<16x128xf32>
    %47 = vector.broadcast %38 : vector<1x128xf32> to vector<16x128xf32>
    %48 = arith.addf %46, %47 : vector<16x128xf32>
    %cst_35 = arith.constant 0.000000e+00 : f32
    %49 = vector.broadcast %cst_35 : f32 to vector<16x128xf32>
    %50 = arith.maximumf %48, %49 : vector<16x128xf32>
    %51 = arith.addf %30, %50 : vector<16x128xf32>
    %52 = arith.truncf %51 : vector<16x128xf32> to vector<16x128xbf16>
    %c5 = arith.constant 5 : index
    %c0_36 = arith.constant 0 : index
    %c0_37 = arith.constant 0 : index
    %53 = vector.load %arg2[%c5, %c0_36, %c0_37] : memref<6x128x128xbf16, #tpu.memory_space<vmem>>, vector<1x128x128xbf16>
    %54 = vector.shape_cast %53 : vector<1x128x128xbf16> to vector<128x128xbf16>
    %cst_38 = arith.constant dense<0.000000e+00> : vector<16x128xf32>
    %55 = tpu.matmul %52, %54, %cst_38 {dimension_numbers = #tpu.dot_dimension_numbers<[1], [0], [0], [1], [0, 0, 1, 1], [], []>} : vector<16x128xbf16>, vector<128x128xbf16>, vector<16x128xf32> -> vector<16x128xf32>
    %c5_39 = arith.constant 5 : index
    %c0_40 = arith.constant 0 : index
    %c0_41 = arith.constant 0 : index
    %56 = vector.load %arg3[%c5_39, %c0_40, %c0_41] : memref<6x1x128xf32, #tpu.memory_space<vmem>>, vector<1x1x128xf32>
    %57 = vector.shape_cast %56 : vector<1x1x128xf32> to vector<1x128xf32>
    %58 = vector.broadcast %57 : vector<1x128xf32> to vector<16x128xf32>
    %59 = arith.addf %55, %58 : vector<16x128xf32>
    %c0_42 = arith.constant 0 : index
    %c0_43 = arith.constant 0 : index
    %60 = vector.load %arg4[%c0_42, %c0_43] : memref<16x128xf32, #tpu.memory_space<vmem>>, vector<16x128xf32>
    tpu.vector_store %arg4[%c0_42, %c0_43], %59 {strides = array<i32>} : memref<16x128xf32, #tpu.memory_space<vmem>>, vector<16x128xf32>,
    return
  }
  func.func @transform_0(%arg0: i32) -> (i32, i32) {
    %c0_i32 = arith.constant 0 : i32
    %c0_i32_0 = arith.constant 0 : i32
    return %arg0, %c0_i32 : i32, i32
  }
  func.func @transform_1(%arg0: i32) -> (i32, i32, i32) {
    %c0_i32 = arith.constant 0 : i32
    %c0_i32_0 = arith.constant 0 : i32
    %c0_i32_1 = arith.constant 0 : i32
    %c0_i32_2 = arith.constant 0 : i32
    return %c0_i32, %c0_i32_0, %c0_i32_1 : i32, i32, i32
  }
  func.func @transform_2(%arg0: i32) -> (i32, i32, i32) {
    %c0_i32 = arith.constant 0 : i32
    %c0_i32_0 = arith.constant 0 : i32
    %c0_i32_1 = arith.constant 0 : i32
    %c0_i32_2 = arith.constant 0 : i32
    return %c0_i32, %c0_i32_0, %c0_i32_1 : i32, i32, i32
  }
  func.func @transform_3(%arg0: i32) -> (i32, i32) {
    %c0_i32 = arith.constant 0 : i32
    %c0_i32_0 = arith.constant 0 : i32
    return %arg0, %c0_i32 : i32, i32
  }
}

</mosaic_0001>

<llo_original>
// kernel: baseline_forward.1
$region0: #{baseline_forward.1}
  #allocation0 [shape = 'u32[]', space=smem, size = 0x4, offset = 0x4, fixed_abs, tag = 'smem constant byte address 0x4 - core index']
  #allocation1 [shape = 'u32[144,128]{1,0:T(1,128)}', space=vmem, size = 0x12000, scoped, tag = 'internal scratch']
  %s0 = inlined_call_operand.vmem [shape: bf16[16,128], index: 0, kind: input, shape index: {}]
  %s1 = inlined_call_operand.hbm [shape: bf16[6,128,128], index: 1, kind: input, shape index: {}]
  %s2 = inlined_call_operand.vmem [shape: f32[6,1,128], index: 2, kind: input, shape index: {}]
  %s3 = inlined_call_operand.vmem [shape: f32[16,128], index: 3, kind: output, shape index: {}]
  %s4 = sld [smem:[#allocation0]]
  $region26: #{baseline_forward.1} parent=0
    _
  %s6 = ssub.s32 1, %s4
  %s7 = scalar_select 0, %s6, %s4
  $region1: #{baseline_forward.1} parent=0
    #allocation2 [shape = 'u8[196608]{0}', space=vmem, size = 0x30000, scoped, tag = 'input window, operand 1, single buffered']
    #allocation3 [shape = 's32[1]{0}', space=sflag, size = 0x4, scoped, tag = 'scoped memory for baseline_forward.1']
    %8 = vsyncpa [#allocation3], 0
    // Predicated region
    $region2: #{baseline_forward.1} parent=1 // pred_check
      _
    $region3: #{baseline_forward.1} parent=1 // pred_check_branch
      %10 = sbr.rel (0) target = $region5
    $region4: #{baseline_forward.1} parent=1 // pred_region
      _
    $region5: #{baseline_forward.1} parent=1 // pred_fallthru
      _
    // Predicated region
    $region6: #{baseline_forward.1} parent=1 // pred_check
      _
    $region7: #{baseline_forward.1} parent=1 // pred_check_branch
      %12 = sbr.rel (0) target = $region9
    $region8: #{baseline_forward.1} parent=1 // pred_region
      %s14 = ssub.s32 6144, 6144
      %15 = vsyncadd [#allocation3], %s14
      %s16 = sshll.u32 [#allocation2], 4
      %s17 = int_to_ptr.vmem [resolvable:$true] %s16
      %22 = dma.hbm_to_vmem [thread:$0]  %s1, 6144, %s17, [#allocation3], 64, 64, 4
    $region9: #{baseline_forward.1} parent=1 // pred_fallthru
      _
    // Predicated region
    $region10: #{baseline_forward.1} parent=1 // pred_check
      _
    $region11: #{baseline_forward.1} parent=1 // pred_check_branch
      %24 = sbr.rel (0) target = $region13
    $region12: #{baseline_forward.1} parent=1 // pred_region
      _
    $region13: #{baseline_forward.1} parent=1 // pred_fallthru
      _
    // Predicated region
    $region14: #{baseline_forward.1} parent=1 // pred_check
      _
    $region15: #{baseline_forward.1} parent=1 // pred_check_branch
      %26 = sbr.rel (0) target = $region17
    $region16: #{baseline_forward.1} parent=1 // pred_region
      %27 = dma.done [#allocation3], 6144
    $region17: #{baseline_forward.1} parent=1 // pred_fallthru
      _
    %v29 = vld [vmem:[%s0] sm:$0xf]
    %v30 = vld [vmem:[%s0 + $0x4] sm:$0xf]
    %v31 = vld [vmem:[#allocation2] sm:$0xf]
    %v32 = vld [vmem:[#allocation2 + $0x4] sm:$0xf]
    %v33 = vld [vmem:[#allocation2 + $0x8] sm:$0xf]
    %v34 = vld [vmem:[#allocation2 + $0xc] sm:$0xf]
    %v35 = vld [vmem:[#allocation2 + $0x10] sm:$0xf]
    %v36 = vld [vmem:[#allocation2 + $0x14] sm:$0xf]
    %v37 = vld [vmem:[#allocation2 + $0x18] sm:$0xf]
    %v38 = vld [vmem:[#allocation2 + $0x1c] sm:$0xf]
    %v39 = vld [vmem:[#allocation2 + $0x20] sm:$0xf]
    %v40 = vld [vmem:[#allocation2 + $0x24] sm:$0xf]
    %v41 = vld [vmem:[#allocation2 + $0x28] sm:$0xf]
    %v42 = vld [vmem:[#allocation2 + $0x2c] sm:$0xf]
    %v43 = vld [vmem:[#allocation2 + $0x30] sm:$0xf]
    %v44 = vld [vmem:[#allocation2 + $0x34] sm:$0xf]
    %v45 = vld [vmem:[#allocation2 + $0x38] sm:$0xf]
    %v46 = vld [vmem:[#allocation2 + $0x3c] sm:$0xf]
    %v47 = vld [vmem:[%s2] sm:$0x1]
    %v49 = vlaneseq
    %v50 = vshrl.u32 %v49, 7
    %v51 = vsub.s32 0, %v50
    %v52 = vrot.slane %v47, %v51
    %v56 = vunpack.c.l.b16 %v29
    %v57 = vunpack.c.l.b16 %v30
    %v58 = vpack.c.b16 %v57, %v56
    %v76 = vunpack.c.l.b16 %v31
    %v77 = vunpack.c.l.b16 %v32
    %v78 = vunpack.c.l.b16 %v33
    %v79 = vunpack.c.l.b16 %v34
    %v80 = vunpack.c.l.b16 %v35
    %v81 = vunpack.c.l.b16 %v36
    %v82 = vunpack.c.l.b16 %v37
    %v83 = vunpack.c.l.b16 %v38
    %v84 = vunpack.c.l.b16 %v39
    %v85 = vunpack.c.l.b16 %v40
    %v86 = vunpack.c.l.b16 %v41
    %v87 = vunpack.c.l.b16 %v42
    %v88 = vunpack.c.l.b16 %v43
    %v89 = vunpack.c.l.b16 %v44
    %v90 = vunpack.c.l.b16 %v45
    %v91 = vunpack.c.l.b16 %v46
    %v92 = vpack.c.b16 %v77, %v76
    %v93 = vpack.c.b16 %v79, %v78
    %v94 = vpack.c.b16 %v81, %v80
    %v95 = vpack.c.b16 %v83, %v82
    %v96 = vpack.c.b16 %v85, %v84
    %v97 = vpack.c.b16 %v87, %v86
    %v98 = vpack.c.b16 %v89, %v88
    %v99 = vpack.c.b16 %v91, %v90
    %108 = vmatprep.subr.bf16.mxu0 0
    %109 = vmatpush1.bf16.msra.mxu0 %v92
    %110 = vmatprep.subr.bf16.mxu0 0
    %111 = vmatpush1.bf16.msra.mxu0 %v93
    %112 = vmatprep.subr.bf16.mxu0 0
    %113 = vmatpush1.bf16.msra.mxu0 %v94
    %114 = vmatprep.subr.bf16.mxu0 0
    %115 = vmatpush1.bf16.msra.mxu0 %v95
    %116 = vmatprep.subr.bf16.mxu0 0
    %117 = vmatpush1.bf16.msra.mxu0 %v96
    %118 = vmatprep.subr.bf16.mxu0 0
    %119 = vmatpush1.bf16.msra.mxu0 %v97
    %120 = vmatprep.subr.bf16.mxu0 0
    %121 = vmatpush1.bf16.msra.mxu0 %v98
    %122 = vmatprep.subr.bf16.mxu0 0
    %123 = vmatpush1.bf16.msra.mxu0 %v99
    %124 = vmatprep.subr.bf16.mxu0 0
    %125 = vmatpush1.bf16.msra.mxu0 0
    %126 = vmatprep.subr.bf16.mxu0 0
    %127 = vmatpush1.bf16.msra.mxu0 0
    %128 = vmatprep.subr.bf16.mxu0 0
    %129 = vmatpush1.bf16.msra.mxu0 0
    %130 = vmatprep.subr.bf16.mxu0 0
    %131 = vmatpush1.bf16.msra.mxu0 0
    %132 = vmatprep.subr.bf16.mxu0 0
    %133 = vmatpush1.bf16.msra.mxu0 0
    %134 = vmatprep.subr.bf16.mxu0 0
    %135 = vmatpush1.bf16.msra.mxu0 0
    %136 = vmatprep.subr.bf16.mxu0 0
    %137 = vmatpush1.bf16.msra.mxu0 0
    %138 = vmatprep.subr.bf16.mxu0 0
    %139 = vmatpush1.bf16.msra.mxu0 0
    %140 = vmatprep.mubr.bf16.mxu0 0
    %141 = vmatmul.mubr.bf16.gmra.mrb[0].mxu0 %v58
    %v142 = vpop.f32.mrb[0].mxu0
    %v143 = vadd.f32 %v52, %v142
    %v144 = vpop.f32.mrb[0].mxu0
    %v145 = vpop.f32.mrb[0].mxu0
    %v146 = vadd.f32 %v52, %v145
    %v147 = vpop.f32.mrb[0].mxu0
    %148 = vdwg.mxu0
    %v149 = vmax.f32 %v143, 0.0
    %v150 = vmax.f32 %v146, 0.0
    %s151 = scalar_lea.vmem [#allocation2], 64
    %v152 = vld [vmem:[%s151] sm:$0xf]
    %v153 = vld [vmem:[%s151 + $0x4] sm:$0xf]
    %v154 = vld [vmem:[%s151 + $0x8] sm:$0xf]
    %v155 = vld [vmem:[%s151 + $0xc] sm:$0xf]
    %v156 = vld [vmem:[%s151 + $0x10] sm:$0xf]
    %v157 = vld [vmem:[%s151 + $0x14] sm:$0xf]
    %v158 = vld [vmem:[%s151 + $0x18] sm:$0xf]
    %v159 = vld [vmem:[%s151 + $0x1c] sm:$0xf]
    %v160 = vld [vmem:[%s151 + $0x20] sm:$0xf]
    %v161 = vld [vmem:[%s151 + $0x24] sm:$0xf]
    %v162 = vld [vmem:[%s151 + $0x28] sm:$0xf]
    %v163 = vld [vmem:[%s151 + $0x2c] sm:$0xf]
    %v164 = vld [vmem:[%s151 + $0x30] sm:$0xf]
    %v165 = vld [vmem:[%s151 + $0x34] sm:$0xf]
    %v166 = vld [vmem:[%s151 + $0x38] sm:$0xf]
    %v167 = vld [vmem:[%s151 + $0x3c] sm:$0xf]
    %s168 = scalar_lea.vmem [#allocation2], 128
    %v169 = vld [vmem:[%s168] sm:$0xf]
    %v170 = vld [vmem:[%s168 + $0x4] sm:$0xf]
    %v171 = vld [vmem:[%s168 + $0x8] sm:$0xf]
    %v172 = vld [vmem:[%s168 + $0xc] sm:$0xf]
    %v173 = vld [vmem:[%s168 + $0x10] sm:$0xf]
    %v174 = vld [vmem:[%s168 + $0x14] sm:$0xf]
    %v175 = vld [vmem:[%s168 + $0x18] sm:$0xf]
    %v176 = vld [vmem:[%s168 + $0x1c] sm:$0xf]
    %v177 = vld [vmem:[%s168 + $0x20] sm:$0xf]
    %v178 = vld [vmem:[%s168 + $0x24] sm:$0xf]
    %v179 = vld [vmem:[%s168 + $0x28] sm:$0xf]
    %v180 = vld [vmem:[%s168 + $0x2c] sm:$0xf]
    %v181 = vld [vmem:[%s168 + $0x30] sm:$0xf]
    %v182 = vld [vmem:[%s168 + $0x34] sm:$0xf]
    %v183 = vld [vmem:[%s168 + $0x38] sm:$0xf]
    %v184 = vld [vmem:[%s168 + $0x3c] sm:$0xf]
    %s185 = scalar_lea.vmem %s2, 1
    %v186 = vld [vmem:[%s185] sm:$0x1]
    %s187 = scalar_lea.vmem %s2, 2
    %v188 = vld [vmem:[%s187] sm:$0x1]
    %v189 = vpack.c.bf16 %v150, %v149
    %v191 = vlaneseq
    %v192 = vshrl.u32 %v191, 7
    %v193 = vsub.s32 0, %v192
    %v194 = vrot.slane %v186, %v193
    %v212 = vunpack.c.l.b16 %v152
    %v213 = vunpack.c.l.b16 %v153
    %v214 = vunpack.c.l.b16 %v154
    %v215 = vunpack.c.l.b16 %v155
    %v216 = vunpack.c.l.b16 %v156
    %v217 = vunpack.c.l.b16 %v157
    %v218 = vunpack.c.l.b16 %v158
    %v219 = vunpack.c.l.b16 %v159
    %v220 = vunpack.c.l.b16 %v160
    %v221 = vunpack.c.l.b16 %v161
    %v222 = vunpack.c.l.b16 %v162
    %v223 = vunpack.c.l.b16 %v163
    %v224 = vunpack.c.l.b16 %v164
    %v225 = vunpack.c.l.b16 %v165
    %v226 = vunpack.c.l.b16 %v166
    %v227 = vunpack.c.l.b16 %v167
    %v228 = vpack.c.b16 %v213, %v212
    %v229 = vpack.c.b16 %v215, %v214
    %v230 = vpack.c.b16 %v217, %v216
    %v231 = vpack.c.b16 %v219, %v218
    %v232 = vpack.c.b16 %v221, %v220
    %v233 = vpack.c.b16 %v223, %v222
    %v234 = vpack.c.b16 %v225, %v224
    %v235 = vpack.c.b16 %v227, %v226
    %244 = vmatprep.subr.bf16.mxu0 0
    %245 = vmatpush1.bf16.msra.mxu0 %v228
    %246 = vmatprep.subr.bf16.mxu0 0
    %247 = vmatpush1.bf16.msra.mxu0 %v229
    %248 = vmatprep.subr.bf16.mxu0 0
    %249 = vmatpush1.bf16.msra.mxu0 %v230
    %250 = vmatprep.subr.bf16.mxu0 0
    %251 = vmatpush1.bf16.msra.mxu0 %v231
    %252 = vmatprep.subr.bf16.mxu0 0
    %253 = vmatpush1.bf16.msra.mxu0 %v232
    %254 = vmatprep.subr.bf16.mxu0 0
    %255 = vmatpush1.bf16.msra.mxu0 %v233
    %256 = vmatprep.subr.bf16.mxu0 0
    %257 = vmatpush1.bf16.msra.mxu0 %v234
    %258 = vmatprep.subr.bf16.mxu0 0
    %259 = vmatpush1.bf16.msra.mxu0 %v235
    %260 = vmatprep.subr.bf16.mxu0 0
    %261 = vmatpush1.bf16.msra.mxu0 0
    %262 = vmatprep.subr.bf16.mxu0 0
    %263 = vmatpush1.bf16.msra.mxu0 0
    %264 = vmatprep.subr.bf16.mxu0 0
    %265 = vmatpush1.bf16.msra.mxu0 0
    %266 = vmatprep.subr.bf16.mxu0 0
    %267 = vmatpush1.bf16.msra.mxu0 0
    %268 = vmatprep.subr.bf16.mxu0 0
    %269 = vmatpush1.bf16.msra.mxu0 0
    %270 = vmatprep.subr.bf16.mxu0 0
    %271 = vmatpush1.bf16.msra.mxu0 0
    %272 = vmatprep.subr.bf16.mxu0 0
    %273 = vmatpush1.bf16.msra.mxu0 0
    %274 = vmatprep.subr.bf16.mxu0 0
    %275 = vmatpush1.bf16.msra.mxu0 0
    %276 = vmatprep.mubr.bf16.mxu0 0
    %277 = vmatmul.mubr.bf16.gmra.mrb[0].mxu0 %v189
    %v278 = vpop.f32.mrb[0].mxu0
    %v279 = vadd.f32 %v194, %v278
    %v280 = vpop.f32.mrb[0].mxu0
    %v281 = vpop.f32.mrb[0].mxu0
    %v282 = vadd.f32 %v194, %v281
    %v283 = vpop.f32.mrb[0].mxu0
    %284 = vdwg.mxu0
    %v285 = vmax.f32 %v279, 0.0
    %v286 = vmax.f32 %v282, 0.0
    %v287 = vpack.c.bf16 %v286, %v285
    %v289 = vlaneseq
    %v290 = vshrl.u32 %v289, 7
    %v291 = vsub.s32 0, %v290
    %v292 = vrot.slane %v188, %v291
    %v310 = vunpack.c.l.b16 %v169
    %v311 = vunpack.c.l.b16 %v170
    %v312 = vunpack.c.l.b16 %v171
    %v313 = vunpack.c.l.b16 %v172
    %v314 = vunpack.c.l.b16 %v173
    %v315 = vunpack.c.l.b16 %v174
    %v316 = vunpack.c.l.b16 %v175
    %v317 = vunpack.c.l.b16 %v176
    %v318 = vunpack.c.l.b16 %v177
    %v319 = vunpack.c.l.b16 %v178
    %v320 = vunpack.c.l.b16 %v179
    %v321 = vunpack.c.l.b16 %v180
    %v322 = vunpack.c.l.b16 %v181
    %v323 = vunpack.c.l.b16 %v182
    %v324 = vunpack.c.l.b16 %v183
    %v325 = vunpack.c.l.b16 %v184
    %v326 = vpack.c.b16 %v311, %v310
    %v327 = vpack.c.b16 %v313, %v312
    %v328 = vpack.c.b16 %v315, %v314
    %v329 = vpack.c.b16 %v317, %v316
    %v330 = vpack.c.b16 %v319, %v318
    %v331 = vpack.c.b16 %v321, %v320
    %v332 = vpack.c.b16 %v323, %v322
    %v333 = vpack.c.b16 %v325, %v324
    %342 = vmatprep.subr.bf16.mxu0 0
    %343 = vmatpush1.bf16.msra.mxu0 %v326
    %344 = vmatprep.subr.bf16.mxu0 0
    %345 = vmatpush1.bf16.msra.mxu0 %v327
    %346 = vmatprep.subr.bf16.mxu0 0
    %347 = vmatpush1.bf16.msra.mxu0 %v328
    %348 = vmatprep.subr.bf16.mxu0 0
    %349 = vmatpush1.bf16.msra.mxu0 %v329
    %350 = vmatprep.subr.bf16.mxu0 0
    %351 = vmatpush1.bf16.msra.mxu0 %v330
    %352 = vmatprep.subr.bf16.mxu0 0
    %353 = vmatpush1.bf16.msra.mxu0 %v331
    %354 = vmatprep.subr.bf16.mxu0 0
    %355 = vmatpush1.bf16.msra.mxu0 %v332
    %356 = vmatprep.subr.bf16.mxu0 0
    %357 = vmatpush1.bf16.msra.mxu0 %v333
    %358 = vmatprep.subr.bf16.mxu0 0
    %359 = vmatpush1.bf16.msra.mxu0 0
    %360 = vmatprep.subr.bf16.mxu0 0
    %361 = vmatpush1.bf16.msra.mxu0 0
    %362 = vmatprep.subr.bf16.mxu0 0
    %363 = vmatpush1.bf16.msra.mxu0 0
    %364 = vmatprep.subr.bf16.mxu0 0
    %365 = vmatpush1.bf16.msra.mxu0 0
    %366 = vmatprep.subr.bf16.mxu0 0
    %367 = vmatpush1.bf16.msra.mxu0 0
    %368 = vmatprep.subr.bf16.mxu0 0
    %369 = vmatpush1.bf16.msra.mxu0 0
    %370 = vmatprep.subr.bf16.mxu0 0
    %371 = vmatpush1.bf16.msra.mxu0 0
    %372 = vmatprep.subr.bf16.mxu0 0
    %373 = vmatpush1.bf16.msra.mxu0 0
    %374 = vmatprep.mubr.bf16.mxu0 0
    %375 = vmatmul.mubr.bf16.gmra.mrb[0].mxu0 %v287
    %v376 = vpop.f32.mrb[0].mxu0
    %v377 = vadd.f32 %v292, %v376
    %v378 = vpop.f32.mrb[0].mxu0
    %v379 = vpop.f32.mrb[0].mxu0
    %v380 = vadd.f32 %v292, %v379
    %v381 = vpop.f32.mrb[0].mxu0
    %382 = vdwg.mxu0
    %v383 = vmax.f32 %v377, 0.0
    %v384 = vmax.f32 %v380, 0.0
    %v385 = vadd.f32 %v149, %v383
    %v386 = vadd.f32 %v150, %v384
    %s387 = scalar_lea.vmem [#allocation2], 192
    %v388 = vld [vmem:[%s387] sm:$0xf]
    %v389 = vld [vmem:[%s387 + $0x4] sm:$0xf]
    %v390 = vld [vmem:[%s387 + $0x8] sm:$0xf]
    %v391 = vld [vmem:[%s387 + $0xc] sm:$0xf]
    %v392 = vld [vmem:[%s387 + $0x10] sm:$0xf]
    %v393 = vld [vmem:[%s387 + $0x14] sm:$0xf]
    %v394 = vld [vmem:[%s387 + $0x18] sm:$0xf]
    %v395 = vld [vmem:[%s387 + $0x1c] sm:$0xf]
    %v396 = vld [vmem:[%s387 + $0x20] sm:$0xf]
    %v397 = vld [vmem:[%s387 + $0x24] sm:$0xf]
    %v398 = vld [vmem:[%s387 + $0x28] sm:$0xf]
    %v399 = vld [vmem:[%s387 + $0x2c] sm:$0xf]
    %v400 = vld [vmem:[%s387 + $0x30] sm:$0xf]
    %v401 = vld [vmem:[%s387 + $0x34] sm:$0xf]
    %v402 = vld [vmem:[%s387 + $0x38] sm:$0xf]
    %v403 = vld [vmem:[%s387 + $0x3c] sm:$0xf]
    %s404 = scalar_lea.vmem [#allocation2], 256
    %v405 = vld [vmem:[%s404] sm:$0xf]
    %v406 = vld [vmem:[%s404 + $0x4] sm:$0xf]
    %v407 = vld [vmem:[%s404 + $0x8] sm:$0xf]
    %v408 = vld [vmem:[%s404 + $0xc] sm:$0xf]
    %v409 = vld [vmem:[%s404 + $0x10] sm:$0xf]
    %v410 = vld [vmem:[%s404 + $0x14] sm:$0xf]
    %v411 = vld [vmem:[%s404 + $0x18] sm:$0xf]
    %v412 = vld [vmem:[%s404 + $0x1c] sm:$0xf]
    %v413 = vld [vmem:[%s404 + $0x20] sm:$0xf]
    %v414 = vld [vmem:[%s404 + $0x24] sm:$0xf]
    %v415 = vld [vmem:[%s404 + $0x28] sm:$0xf]
    %v416 = vld [vmem:[%s404 + $0x2c] sm:$0xf]
    %v417 = vld [vmem:[%s404 + $0x30] sm:$0xf]
    %v418 = vld [vmem:[%s404 + $0x34] sm:$0xf]
    %v419 = vld [vmem:[%s404 + $0x38] sm:$0xf]
    %v420 = vld [vmem:[%s404 + $0x3c] sm:$0xf]
    %s421 = scalar_lea.vmem %s2, 3
    %v422 = vld [vmem:[%s421] sm:$0x1]
    %s423 = scalar_lea.vmem %s2, 4
    %v424 = vld [vmem:[%s423] sm:$0x1]
    %v425 = vpack.c.bf16 %v386, %v385
    %v427 = vlaneseq
    %v428 = vshrl.u32 %v427, 7
    %v429 = vsub.s32 0, %v428
    %v430 = vrot.slane %v422, %v429
    %v448 = vunpack.c.l.b16 %v388
    %v449 = vunpack.c.l.b16 %v389
    %v450 = vunpack.c.l.b16 %v390
    %v451 = vunpack.c.l.b16 %v391
    %v452 = vunpack.c.l.b16 %v392
    %v453 = vunpack.c.l.b16 %v393
    %v454 = vunpack.c.l.b16 %v394
    %v455 = vunpack.c.l.b16 %v395
    %v456 = vunpack.c.l.b16 %v396
    %v457 = vunpack.c.l.b16 %v397
    %v458 = vunpack.c.l.b16 %v398
    %v459 = vunpack.c.l.b16 %v399
    %v460 = vunpack.c.l.b16 %v400
    %v461 = vunpack.c.l.b16 %v401
    %v462 = vunpack.c.l.b16 %v402
    %v463 = vunpack.c.l.b16 %v403
    %v464 = vpack.c.b16 %v449, %v448
    %v465 = vpack.c.b16 %v451, %v450
    %v466 = vpack.c.b16 %v453, %v452
    %v467 = vpack.c.b16 %v455, %v454
    %v468 = vpack.c.b16 %v457, %v456
    %v469 = vpack.c.b16 %v459, %v458
    %v470 = vpack.c.b16 %v461, %v460
    %v471 = vpack.c.b16 %v463, %v462
    %480 = vmatprep.subr.bf16.mxu0 0
    %481 = vmatpush1.bf16.msra.mxu0 %v464
    %482 = vmatprep.subr.bf16.mxu0 0
    %483 = vmatpush1.bf16.msra.mxu0 %v465
    %484 = vmatprep.subr.bf16.mxu0 0
    %485 = vmatpush1.bf16.msra.mxu0 %v466
    %486 = vmatprep.subr.bf16.mxu0 0
    %487 = vmatpush1.bf16.msra.mxu0 %v467
    %488 = vmatprep.subr.bf16.mxu0 0
    %489 = vmatpush1.bf16.msra.mxu0 %v468
    %490 = vmatprep.subr.bf16.mxu0 0
    %491 = vmatpush1.bf16.msra.mxu0 %v469
    %492 = vmatprep.subr.bf16.mxu0 0
    %493 = vmatpush1.bf16.msra.mxu0 %v470
    %494 = vmatprep.subr.bf16.mxu0 0
    %495 = vmatpush1.bf16.msra.mxu0 %v471
    %496 = vmatprep.subr.bf16.mxu0 0
    %497 = vmatpush1.bf16.msra.mxu0 0
    %498 = vmatprep.subr.bf16.mxu0 0
    %499 = vmatpush1.bf16.msra.mxu0 0
    %500 = vmatprep.subr.bf16.mxu0 0
    %501 = vmatpush1.bf16.msra.mxu0 0
    %502 = vmatprep.subr.bf16.mxu0 0
    %503 = vmatpush1.bf16.msra.mxu0 0
    %504 = vmatprep.subr.bf16.mxu0 0
    %505 = vmatpush1.bf16.msra.mxu0 0
    %506 = vmatprep.subr.bf16.mxu0 0
    %507 = vmatpush1.bf16.msra.mxu0 0
    %508 = vmatprep.subr.bf16.mxu0 0
    %509 = vmatpush1.bf16.msra.mxu0 0
    %510 = vmatprep.subr.bf16.mxu0 0
    %511 = vmatpush1.bf16.msra.mxu0 0
    %512 = vmatprep.mubr.bf16.mxu0 0
    %513 = vmatmul.mubr.bf16.gmra.mrb[0].mxu0 %v425
    %v514 = vpop.f32.mrb[0].mxu0
    %v515 = vadd.f32 %v430, %v514
    %v516 = vpop.f32.mrb[0].mxu0
    %v517 = vpop.f32.mrb[0].mxu0
    %v518 = vadd.f32 %v430, %v517
    %v519 = vpop.f32.mrb[0].mxu0
    %520 = vdwg.mxu0
    %v521 = vmax.f32 %v515, 0.0
    %v522 = vmax.f32 %v518, 0.0
    %v523 = vpack.c.bf16 %v522, %v521
    %v525 = vlaneseq
    %v526 = vshrl.u32 %v525, 7
    %v527 = vsub.s32 0, %v526
    %v528 = vrot.slane %v424, %v527
    %v546 = vunpack.c.l.b16 %v405
    %v547 = vunpack.c.l.b16 %v406
    %v548 = vunpack.c.l.b16 %v407
    %v549 = vunpack.c.l.b16 %v408
    %v550 = vunpack.c.l.b16 %v409
    %v551 = vunpack.c.l.b16 %v410
    %v552 = vunpack.c.l.b16 %v411
    %v553 = vunpack.c.l.b16 %v412
    %v554 = vunpack.c.l.b16 %v413
    %v555 = vunpack.c.l.b16 %v414
    %v556 = vunpack.c.l.b16 %v415
    %v557 = vunpack.c.l.b16 %v416
    %v558 = vunpack.c.l.b16 %v417
    %v559 = vunpack.c.l.b16 %v418
    %v560 = vunpack.c.l.b16 %v419
    %v561 = vunpack.c.l.b16 %v420
    %v562 = vpack.c.b16 %v547, %v546
    %v563 = vpack.c.b16 %v549, %v548
    %v564 = vpack.c.b16 %v551, %v550
    %v565 = vpack.c.b16 %v553, %v552
    %v566 = vpack.c.b16 %v555, %v554
    %v567 = vpack.c.b16 %v557, %v556
    %v568 = vpack.c.b16 %v559, %v558
    %v569 = vpack.c.b16 %v561, %v560
    %578 = vmatprep.subr.bf16.mxu0 0
    %579 = vmatpush1.bf16.msra.mxu0 %v562
    %580 = vmatprep.subr.bf16.mxu0 0
    %581 = vmatpush1.bf16.msra.mxu0 %v563
    %582 = vmatprep.subr.bf16.mxu0 0
    %583 = vmatpush1.bf16.msra.mxu0 %v564
    %584 = vmatprep.subr.bf16.mxu0 0
    %585 = vmatpush1.bf16.msra.mxu0 %v565
    %586 = vmatprep.subr.bf16.mxu0 0
    %587 = vmatpush1.bf16.msra.mxu0 %v566
    %588 = vmatprep.subr.bf16.mxu0 0
    %589 = vmatpush1.bf16.msra.mxu0 %v567
    %590 = vmatprep.subr.bf16.mxu0 0
    %591 = vmatpush1.bf16.msra.mxu0 %v568
    %592 = vmatprep.subr.bf16.mxu0 0
    %593 = vmatpush1.bf16.msra.mxu0 %v569
    %594 = vmatprep.subr.bf16.mxu0 0
    %595 = vmatpush1.bf16.msra.mxu0 0
    %596 = vmatprep.subr.bf16.mxu0 0
    %597 = vmatpush1.bf16.msra.mxu0 0
    %598 = vmatprep.subr.bf16.mxu0 0
    %599 = vmatpush1.bf16.msra.mxu0 0
    %600 = vmatprep.subr.bf16.mxu0 0
    %601 = vmatpush1.bf16.msra.mxu0 0
    %602 = vmatprep.subr.bf16.mxu0 0
    %603 = vmatpush1.bf16.msra.mxu0 0
    %604 = vmatprep.subr.bf16.mxu0 0
    %605 = vmatpush1.bf16.msra.mxu0 0
    %606 = vmatprep.subr.bf16.mxu0 0
    %607 = vmatpush1.bf16.msra.mxu0 0
    %608 = vmatprep.subr.bf16.mxu0 0
    %609 = vmatpush1.bf16.msra.mxu0 0
    %610 = vmatprep.mubr.bf16.mxu0 0
    %611 = vmatmul.mubr.bf16.gmra.mrb[0].mxu0 %v523
    %v612 = vpop.f32.mrb[0].mxu0
    %v613 = vadd.f32 %v528, %v612
    %v614 = vpop.f32.mrb[0].mxu0
    %v615 = vpop.f32.mrb[0].mxu0
    %v616 = vadd.f32 %v528, %v615
    %v617 = vpop.f32.mrb[0].mxu0
    %618 = vdwg.mxu0
    %v619 = vmax.f32 %v613, 0.0
    %v620 = vmax.f32 %v616, 0.0
    %v621 = vadd.f32 %v385, %v619
    %v622 = vadd.f32 %v386, %v620
    %v623 = vpack.c.bf16 %v622, %v621
    %s624 = scalar_lea.vmem [#allocation2], 320
    %v625 = vld [vmem:[%s624] sm:$0xf]
    %v626 = vld [vmem:[%s624 + $0x4] sm:$0xf]
    %v627 = vld [vmem:[%s624 + $0x8] sm:$0xf]
    %v628 = vld [vmem:[%s624 + $0xc] sm:$0xf]
    %v629 = vld [vmem:[%s624 + $0x10] sm:$0xf]
    %v630 = vld [vmem:[%s624 + $0x14] sm:$0xf]
    %v631 = vld [vmem:[%s624 + $0x18] sm:$0xf]
    %v632 = vld [vmem:[%s624 + $0x1c] sm:$0xf]
    %v633 = vld [vmem:[%s624 + $0x20] sm:$0xf]
    %v634 = vld [vmem:[%s624 + $0x24] sm:$0xf]
    %v635 = vld [vmem:[%s624 + $0x28] sm:$0xf]
    %v636 = vld [vmem:[%s624 + $0x2c] sm:$0xf]
    %v637 = vld [vmem:[%s624 + $0x30] sm:$0xf]
    %v638 = vld [vmem:[%s624 + $0x34] sm:$0xf]
    %v639 = vld [vmem:[%s624 + $0x38] sm:$0xf]
    %v640 = vld [vmem:[%s624 + $0x3c] sm:$0xf]
    %s641 = scalar_lea.vmem %s2, 5
    %v642 = vld [vmem:[%s641] sm:$0x1]
    %v644 = vlaneseq
    %v645 = vshrl.u32 %v644, 7
    %v646 = vsub.s32 0, %v645
    %v647 = vrot.slane %v642, %v646
    %v665 = vunpack.c.l.b16 %v625
    %v666 = vunpack.c.l.b16 %v626
    %v667 = vunpack.c.l.b16 %v627
    %v668 = vunpack.c.l.b16 %v628
    %v669 = vunpack.c.l.b16 %v629
    %v670 = vunpack.c.l.b16 %v630
    %v671 = vunpack.c.l.b16 %v631
    %v672 = vunpack.c.l.b16 %v632
    %v673 = vunpack.c.l.b16 %v633
    %v674 = vunpack.c.l.b16 %v634
    %v675 = vunpack.c.l.b16 %v635
    %v676 = vunpack.c.l.b16 %v636
    %v677 = vunpack.c.l.b16 %v637
    %v678 = vunpack.c.l.b16 %v638
    %v679 = vunpack.c.l.b16 %v639
    %v680 = vunpack.c.l.b16 %v640
    %v681 = vpack.c.b16 %v666, %v665
    %v682 = vpack.c.b16 %v668, %v667
    %v683 = vpack.c.b16 %v670, %v669
    %v684 = vpack.c.b16 %v672, %v671
    %v685 = vpack.c.b16 %v674, %v673
    %v686 = vpack.c.b16 %v676, %v675
    %v687 = vpack.c.b16 %v678, %v677
    %v688 = vpack.c.b16 %v680, %v679
    %697 = vmatprep.subr.bf16.mxu0 0
    %698 = vmatpush1.bf16.msra.mxu0 %v681
    %699 = vmatprep.subr.bf16.mxu0 0
    %700 = vmatpush1.bf16.msra.mxu0 %v682
    %701 = vmatprep.subr.bf16.mxu0 0
    %702 = vmatpush1.bf16.msra.mxu0 %v683
    %703 = vmatprep.subr.bf16.mxu0 0
    %704 = vmatpush1.bf16.msra.mxu0 %v684
    %705 = vmatprep.subr.bf16.mxu0 0
    %706 = vmatpush1.bf16.msra.mxu0 %v685
    %707 = vmatprep.subr.bf16.mxu0 0
    %708 = vmatpush1.bf16.msra.mxu0 %v686
    %709 = vmatprep.subr.bf16.mxu0 0
    %710 = vmatpush1.bf16.msra.mxu0 %v687
    %711 = vmatprep.subr.bf16.mxu0 0
    %712 = vmatpush1.bf16.msra.mxu0 %v688
    %713 = vmatprep.subr.bf16.mxu0 0
    %714 = vmatpush1.bf16.msra.mxu0 0
    %715 = vmatprep.subr.bf16.mxu0 0
    %716 = vmatpush1.bf16.msra.mxu0 0
    %717 = vmatprep.subr.bf16.mxu0 0
    %718 = vmatpush1.bf16.msra.mxu0 0
    %719 = vmatprep.subr.bf16.mxu0 0
    %720 = vmatpush1.bf16.msra.mxu0 0
    %721 = vmatprep.subr.bf16.mxu0 0
    %722 = vmatpush1.bf16.msra.mxu0 0
    %723 = vmatprep.subr.bf16.mxu0 0
    %724 = vmatpush1.bf16.msra.mxu0 0
    %725 = vmatprep.subr.bf16.mxu0 0
    %726 = vmatpush1.bf16.msra.mxu0 0
    %727 = vmatprep.subr.bf16.mxu0 0
    %728 = vmatpush1.bf16.msra.mxu0 0
    %729 = vmatprep.mubr.bf16.mxu0 0
    %730 = vmatmul.mubr.bf16.gmra.mrb[0].mxu0 %v623
    %v731 = vpop.f32.mrb[0].mxu0
    %v732 = vadd.f32 %v647, %v731
    %v733 = vpop.f32.mrb[0].mxu0
    %v734 = vpop.f32.mrb[0].mxu0
    %v735 = vadd.f32 %v647, %v734
    %v736 = vpop.f32.mrb[0].mxu0
    %737 = vdwg.mxu0
    %738 = vst [vmem:[%s3] sm:$0xff] %v732
    %739 = vst [vmem:[%s3 + $0x8] sm:$0xff] %v735
    // Predicated region
    $region18: #{baseline_forward.1} parent=1 // pred_check
      _
    $region19: #{baseline_forward.1} parent=1 // pred_check_branch
      %741 = sbr.rel (0) target = $region21
    $region20: #{baseline_forward.1} parent=1 // pred_region
      _
    $region21: #{baseline_forward.1} parent=1 // pred_fallthru
      _
    // Predicated region
    $region22: #{baseline_forward.1} parent=1 // pred_check
      _
    $region23: #{baseline_forward.1} parent=1 // pred_check_branch
      %743 = sbr.rel (0) target = $region25
    $region24: #{baseline_forward.1} parent=1 // pred_region
      _
    $region25: #{baseline_forward.1} parent=1 // pred_fallthru
      _
    %744 = vsyncpa [#allocation3], 1

</llo_original>
